<compile_context>
chip_gen: v5e
topology: v5e:2x2
jax: 0.10.0
libtpu: 0.0.40
codegen_flags: <defaults>
</compile_context>

<pallas_src>
import functools

import jax
import jax.numpy as jnp
from jax import lax
from jax.experimental import pallas as pl
from jax.experimental.pallas import tpu as pltpu


def _round_up(x, m):
    return ((x + m - 1) // m) * m


def policy_kernel(x_ref, w1_ref, b1_ref, w2_ref, b2_ref, wh_ref, bh_ref,
                  out_ref):
    # hidden layer 1: Linear (bf16 MXU inputs, f32 accum) + bias + ReLU in f32
    h1 = jnp.dot(x_ref[...], w1_ref[...],
                 preferred_element_type=jnp.float32) + b1_ref[...]
    h1 = jnp.maximum(h1, 0.0).astype(w2_ref.dtype)

    # hidden layer 2
    h2 = jnp.dot(h1, w2_ref[...],
                 preferred_element_type=jnp.float32) + b2_ref[...]
    h2 = jnp.maximum(h2, 0.0).astype(wh_ref.dtype)

    # fused heads: one matmul producing [TILE_B, 2*n_out] = mean || log_std
    head = jnp.dot(h2, wh_ref[...],
                   preferred_element_type=jnp.float32) + bh_ref[...]

    # clamp only the log_std half (columns >= n_out) to (-20, 2)
    n2 = out_ref.shape[-1]
    col = lax.broadcasted_iota(jnp.int32, head.shape, 1)
    is_logstd = col >= (n2 // 2)
    out_ref[...] = jnp.where(is_logstd, jnp.clip(head, -20.0, 2.0), head)


def policy_forward(x, packed, tile_b=256):
    """x: [B, n_in] float32. packed: dict from pack_params()."""
    B, n_in = x.shape
    hidden = packed["w1"].shape[1]
    n2 = packed["wh"].shape[1]          # 2 * n_out
    n_out = n2 // 2
    compute_dtype = packed["w1"].dtype

    # Batch tile: multiple of 8 (sublane), capped at tile_b; pad B to fit.
    tb = min(tile_b, _round_up(B, 8))
    Bp = _round_up(B, tb)
    xp = x.astype(compute_dtype)
    if Bp != B:
        xp = jnp.pad(xp, ((0, Bp - B), (0, 0)))

    const = lambda i: (0, 0)
    out = pl.pallas_call(
        policy_kernel,
        out_shape=jax.ShapeDtypeStruct((Bp, n2), jnp.float32),
        grid=(Bp // tb,),
        in_specs=[
            pl.BlockSpec((tb, n_in), lambda i: (i, 0)),     # x tile
            pl.BlockSpec((n_in, hidden), const),            # w1 (resident)
            pl.BlockSpec((1, hidden), const),               # b1
            pl.BlockSpec((hidden, hidden), const),          # w2
            pl.BlockSpec((1, hidden), const),               # b2
            pl.BlockSpec((hidden, n2), const),              # wm||ws fused
            pl.BlockSpec((1, n2), const),                   # bm||bs fused
        ],
        out_specs=pl.BlockSpec((tb, n2), lambda i: (i, 0)),
        compiler_params=pltpu.CompilerParams(
            dimension_semantics=("parallel",),
            vmem_limit_bytes=32 * 1024 * 1024,
        ),
    )(xp, packed["w1"], packed["b1"], packed["w2"], packed["b2"],
      packed["wh"], packed["bh"])

    mean = out[:B, :n_out]
    log_std = out[:B, n_out:]
    return mean, log_std


def pack_params(p, compute_dtype=jnp.bfloat16):
    """Pack PyTorch-semantics params into kernel-ready form:
    bf16 MXU weights, f32 biases, heads concatenated along the out dim."""
    return dict(
        w1=p["w1"].astype(compute_dtype),
        b1=p["b1"].astype(jnp.float32),
        w2=p["w2"].astype(compute_dtype),
        b2=p["b2"].astype(jnp.float32),
        wh=jnp.concatenate([p["wm"], p["ws"]], axis=-1).astype(compute_dtype),
        bh=jnp.concatenate([p["bm"], p["bs"]], axis=-1).astype(jnp.float32),
    )


def init_params(key, n_in, n_out, hidden=256):
    """Matches PyTorch init semantics:
    - hidden Linear layers: default U(-1/sqrt(fan_in), 1/sqrt(fan_in))
    - mean / log_std heads: U(-0.003, 0.003)
    Weights stored as [in, out] (transposed vs PyTorch's [out, in])."""
    ks = jax.random.split(key, 8)

    def lin_init(kw, kb, fan_in, fan_out):
        bound = 1.0 / jnp.sqrt(jnp.float32(fan_in))
        w = jax.random.uniform(kw, (fan_in, fan_out), jnp.float32, -bound, bound)
        b = jax.random.uniform(kb, (1, fan_out), jnp.float32, -bound, bound)
        return w, b

    def head_init(kw, kb, fan_in, fan_out):
        w = jax.random.uniform(kw, (fan_in, fan_out), jnp.float32, -0.003, 0.003)
        b = jax.random.uniform(kb, (1, fan_out), jnp.float32, -0.003, 0.003)
        return w, b

    w1, b1 = lin_init(ks[0], ks[1], n_in, hidden)
    w2, b2 = lin_init(ks[2], ks[3], hidden, hidden)
    wm, bm = head_init(ks[4], ks[5], hidden, n_out)
    ws, bs = head_init(ks[6], ks[7], hidden, n_out)
    return dict(w1=w1, b1=b1, w2=w2, b2=b2, wm=wm, bm=bm, ws=ws, bs=bs)


def policy_forward_ref(x, p, compute_dtype=jnp.bfloat16):
    """Pure-JAX reference mirroring the kernel math (bf16 MXU inputs,
    f32 accumulation), for correctness checking."""
    cd = compute_dtype
    h1 = jnp.dot(x.astype(cd), p["w1"].astype(cd),
                 preferred_element_type=jnp.float32) + p["b1"]
    h1 = jnp.maximum(h1, 0.0)
    h2 = jnp.dot(h1.astype(cd), p["w2"].astype(cd),
                 preferred_element_type=jnp.float32) + p["b2"]
    h2 = jnp.maximum(h2, 0.0)
    mean = jnp.dot(h2.astype(cd), p["wm"].astype(cd),
                   preferred_element_type=jnp.float32) + p["bm"]
    log_std = jnp.dot(h2.astype(cd), p["ws"].astype(cd),
                      preferred_element_type=jnp.float32) + p["bs"]
    log_std = jnp.clip(log_std, -20.0, 2.0)
    return mean, log_std


if __name__ == "__main__":
    key = jax.random.PRNGKey(0)
    k_params, k_x = jax.random.split(key)

    batch, n_in, n_out, hidden = 8, 16, 8, 32
    params = init_params(k_params, n_in, n_out, hidden)
    packed = pack_params(params)
    x = jax.random.normal(k_x, (batch, n_in), dtype=jnp.float32)

    mean, log_std = policy_forward(x, packed)
    jax.block_until_ready((mean, log_std))

    mean_ref, log_std_ref = policy_forward_ref(x, params)
    assert mean.shape == (batch, n_out) and log_std.shape == (batch, n_out)
    assert jnp.allclose(mean, mean_ref, atol=2e-3, rtol=2e-3)
    assert jnp.allclose(log_std, log_std_ref, atol=2e-3, rtol=2e-3)
    assert bool(jnp.all(log_std <= 2.0)) and bool(jnp.all(log_std >= -20.0))

    print("KERNEL_OK")
</pallas_src>

<mosaic_0001>
module attributes {stable_mosaic.version = 11 : i64} {
  func.func @policy_kernel(%arg0: i32, %arg1: memref<8x16xbf16, #tpu.memory_space<vmem>>, %arg2: memref<16x32xbf16, #tpu.memory_space<vmem>>, %arg3: memref<1x32xf32, #tpu.memory_space<vmem>>, %arg4: memref<32x32xbf16, #tpu.memory_space<vmem>>, %arg5: memref<1x32xf32, #tpu.memory_space<vmem>>, %arg6: memref<32x16xbf16, #tpu.memory_space<vmem>>, %arg7: memref<1x16xf32, #tpu.memory_space<vmem>>, %arg8: memref<8x16xf32, #tpu.memory_space<vmem>>) attributes {dimension_semantics = [#tpu.dimension_semantics<parallel>], iteration_bounds = array<i64: 1>, scalar_prefetch = 0 : i64, scratch_operands = 0 : i64, tpu.core_type = #tpu.core_type<tc>, window_params = [{transform_indices = @transform_0, window_bounds = array<i64: 8, 16>}, {pipeline_mode = #tpu.pipeline_mode<synchronous>, transform_indices = @transform_1, window_bounds = array<i64: 16, 32>}, {pipeline_mode = #tpu.pipeline_mode<synchronous>, transform_indices = @transform_2, window_bounds = array<i64: 1, 32>}, {pipeline_mode = #tpu.pipeline_mode<synchronous>, transform_indices = @transform_3, window_bounds = array<i64: 32, 32>}, {pipeline_mode = #tpu.pipeline_mode<synchronous>, transform_indices = @transform_4, window_bounds = array<i64: 1, 32>}, {pipeline_mode = #tpu.pipeline_mode<synchronous>, transform_indices = @transform_5, window_bounds = array<i64: 32, 16>}, {pipeline_mode = #tpu.pipeline_mode<synchronous>, transform_indices = @transform_6, window_bounds = array<i64: 1, 16>}, {transform_indices = @transform_7, window_bounds = array<i64: 8, 16>}]} {
    %c0 = arith.constant 0 : index
    %c0_0 = arith.constant 0 : index
    %0 = vector.load %arg1[%c0, %c0_0] : memref<8x16xbf16, #tpu.memory_space<vmem>>, vector<8x16xbf16>
    %c0_1 = arith.constant 0 : index
    %c0_2 = arith.constant 0 : index
    %1 = vector.load %arg2[%c0_1, %c0_2] : memref<16x32xbf16, #tpu.memory_space<vmem>>, vector<16x32xbf16>
    %cst = arith.constant dense<0.000000e+00> : vector<8x32xf32>
    %2 = tpu.matmul %0, %1, %cst {dimension_numbers = #tpu.dot_dimension_numbers<[1], [0], [0], [1], [0, 0, 1, 1], [], []>} : vector<8x16xbf16>, vector<16x32xbf16>, vector<8x32xf32> -> vector<8x32xf32>
    %c0_3 = arith.constant 0 : index
    %c0_4 = arith.constant 0 : index
    %3 = vector.load %arg3[%c0_3, %c0_4] : memref<1x32xf32, #tpu.memory_space<vmem>>, vector<1x32xf32>
    %4 = vector.broadcast %3 : vector<1x32xf32> to vector<8x32xf32>
    %5 = arith.addf %2, %4 : vector<8x32xf32>
    %cst_5 = arith.constant 0.000000e+00 : f32
    %6 = vector.broadcast %cst_5 : f32 to vector<8x32xf32>
    %7 = arith.maximumf %5, %6 : vector<8x32xf32>
    %8 = arith.truncf %7 : vector<8x32xf32> to vector<8x32xbf16>
    %c0_6 = arith.constant 0 : index
    %c0_7 = arith.constant 0 : index
    %9 = vector.load %arg4[%c0_6, %c0_7] : memref<32x32xbf16, #tpu.memory_space<vmem>>, vector<32x32xbf16>
    %cst_8 = arith.constant dense<0.000000e+00> : vector<8x32xf32>
    %10 = tpu.matmul %8, %9, %cst_8 {dimension_numbers = #tpu.dot_dimension_numbers<[1], [0], [0], [1], [0, 0, 1, 1], [], []>} : vector<8x32xbf16>, vector<32x32xbf16>, vector<8x32xf32> -> vector<8x32xf32>
    %c0_9 = arith.constant 0 : index
    %c0_10 = arith.constant 0 : index
    %11 = vector.load %arg5[%c0_9, %c0_10] : memref<1x32xf32, #tpu.memory_space<vmem>>, vector<1x32xf32>
    %12 = vector.broadcast %11 : vector<1x32xf32> to vector<8x32xf32>
    %13 = arith.addf %10, %12 : vector<8x32xf32>
    %cst_11 = arith.constant 0.000000e+00 : f32
    %14 = vector.broadcast %cst_11 : f32 to vector<8x32xf32>
    %15 = arith.maximumf %13, %14 : vector<8x32xf32>
    %16 = arith.truncf %15 : vector<8x32xf32> to vector<8x32xbf16>
    %c0_12 = arith.constant 0 : index
    %c0_13 = arith.constant 0 : index
    %17 = vector.load %arg6[%c0_12, %c0_13] : memref<32x16xbf16, #tpu.memory_space<vmem>>, vector<32x16xbf16>
    %cst_14 = arith.constant dense<0.000000e+00> : vector<8x16xf32>
    %18 = tpu.matmul %16, %17, %cst_14 {dimension_numbers = #tpu.dot_dimension_numbers<[1], [0], [0], [1], [0, 0, 1, 1], [], []>} : vector<8x32xbf16>, vector<32x16xbf16>, vector<8x16xf32> -> vector<8x16xf32>
    %c0_15 = arith.constant 0 : index
    %c0_16 = arith.constant 0 : index
    %19 = vector.load %arg7[%c0_15, %c0_16] : memref<1x16xf32, #tpu.memory_space<vmem>>, vector<1x16xf32>
    %20 = vector.broadcast %19 : vector<1x16xf32> to vector<8x16xf32>
    %21 = arith.addf %18, %20 : vector<8x16xf32>
    %22 = tpu.iota {dimensions = array<i32: 1>} : vector<8x16xi32>
    %c8_i32 = arith.constant 8 : i32
    %23 = vector.broadcast %c8_i32 : i32 to vector<8x16xi32>
    %24 = arith.cmpi sge, %22, %23 : vector<8x16xi32>
    %cst_17 = arith.constant -2.000000e+01 : f32
    %cst_18 = arith.constant 2.000000e+00 : f32
    %25 = vector.broadcast %cst_17 : f32 to vector<8x16xf32>
    %26 = arith.maximumf %25, %21 : vector<8x16xf32>
    %27 = vector.broadcast %cst_18 : f32 to vector<8x16xf32>
    %28 = arith.minimumf %27, %26 : vector<8x16xf32>
    %29 = arith.select %24, %28, %21 : vector<8x16xi1>, vector<8x16xf32>
    %c0_19 = arith.constant 0 : index
    %c0_20 = arith.constant 0 : index
    %30 = vector.load %arg8[%c0_19, %c0_20] : memref<8x16xf32, #tpu.memory_space<vmem>>, vector<8x16xf32>
    tpu.vector_store %arg8[%c0_19, %c0_20], %29 {strides = array<i32>} : memref<8x16xf32, #tpu.memory_space<vmem>>, vector<8x16xf32>,
    return
  }
  func.func @transform_0(%arg0: i32) -> (i32, i32) {
    %c0_i32 = arith.constant 0 : i32
    %c0_i32_0 = arith.constant 0 : i32
    return %arg0, %c0_i32 : i32, i32
  }
  func.func @transform_1(%arg0: i32) -> (i32, i32) {
    %c0_i32 = arith.constant 0 : i32
    %c0_i32_0 = arith.constant 0 : i32
    %c0_i32_1 = arith.constant 0 : i32
    return %c0_i32, %c0_i32_0 : i32, i32
  }
  func.func @transform_2(%arg0: i32) -> (i32, i32) {
    %c0_i32 = arith.constant 0 : i32
    %c0_i32_0 = arith.constant 0 : i32
    %c0_i32_1 = arith.constant 0 : i32
    return %c0_i32, %c0_i32_0 : i32, i32
  }
  func.func @transform_3(%arg0: i32) -> (i32, i32) {
    %c0_i32 = arith.constant 0 : i32
    %c0_i32_0 = arith.constant 0 : i32
    %c0_i32_1 = arith.constant 0 : i32
    return %c0_i32, %c0_i32_0 : i32, i32
  }
  func.func @transform_4(%arg0: i32) -> (i32, i32) {
    %c0_i32 = arith.constant 0 : i32
    %c0_i32_0 = arith.constant 0 : i32
    %c0_i32_1 = arith.constant 0 : i32
    return %c0_i32, %c0_i32_0 : i32, i32
  }
  func.func @transform_5(%arg0: i32) -> (i32, i32) {
    %c0_i32 = arith.constant 0 : i32
    %c0_i32_0 = arith.constant 0 : i32
    %c0_i32_1 = arith.constant 0 : i32
    return %c0_i32, %c0_i32_0 : i32, i32
  }
  func.func @transform_6(%arg0: i32) -> (i32, i32) {
    %c0_i32 = arith.constant 0 : i32
    %c0_i32_0 = arith.constant 0 : i32
    %c0_i32_1 = arith.constant 0 : i32
    return %c0_i32, %c0_i32_0 : i32, i32
  }
  func.func @transform_7(%arg0: i32) -> (i32, i32) {
    %c0_i32 = arith.constant 0 : i32
    %c0_i32_0 = arith.constant 0 : i32
    return %arg0, %c0_i32 : i32, i32
  }
}

</mosaic_0001>

<llo_original>
// kernel: tpu_custom_call.1
$region0: #{tpu_custom_call.1}
  #allocation0 [shape = 'u32[]', space=smem, size = 0x4, offset = 0x4, fixed_abs, tag = 'smem constant byte address 0x4 - core index']
  #allocation1 [shape = 'u32[72,128]{1,0:T(1,128)}', space=vmem, size = 0x9000, scoped, tag = 'internal scratch']
  %s0 = inlined_call_operand.hbm [shape: bf16[8,16], index: 0, kind: input, shape index: {}]
  %s1 = inlined_call_operand.vmem [shape: bf16[16,32], index: 1, kind: input, shape index: {}]
  %s2 = inlined_call_operand.vmem [shape: f32[1,32], index: 2, kind: input, shape index: {}]
  %s3 = inlined_call_operand.vmem [shape: bf16[32,32], index: 3, kind: input, shape index: {}]
  %s4 = inlined_call_operand.vmem [shape: f32[1,32], index: 4, kind: input, shape index: {}]
  %s5 = inlined_call_operand.vmem [shape: bf16[32,16], index: 5, kind: input, shape index: {}]
  %s6 = inlined_call_operand.vmem [shape: f32[1,16], index: 6, kind: input, shape index: {}]
  %s7 = inlined_call_operand.hbm [shape: f32[8,16], index: 7, kind: output, shape index: {}]
  %s8 = sld [smem:[#allocation0]]
  $region42: #{tpu_custom_call.1} parent=0
    _
  %s10 = ssub.s32 1, %s8
  %s11 = scalar_select 0, %s10, %s8
  $region1: #{tpu_custom_call.1} parent=0
    #allocation2 [shape = 'u8[2048]{0}', space=vmem, size = 0x800, scoped, tag = 'input window, operand 0, single buffered']
    #allocation3 [shape = 's32[1]{0}', space=sflag, size = 0x4, scoped, tag = 'scoped memory for tpu_custom_call.1']
    #allocation4 [shape = 's32[1]{0}', space=sflag, size = 0x4, scoped, tag = 'scoped memory for tpu_custom_call.1']
    #allocation5 [shape = 'u8[4096]{0}', space=vmem, size = 0x1000, scoped, tag = 'output window, operand 0, single buffered']
    %12 = vsyncpa [#allocation3], 0
    %13 = vsyncpa [#allocation4], 0
    // Predicated region
    $region2: #{tpu_custom_call.1} parent=1 // pred_check
      _
    $region3: #{tpu_custom_call.1} parent=1 // pred_check_branch
      %15 = sbr.rel (0) target = $region5
    $region4: #{tpu_custom_call.1} parent=1 // pred_region
      %17 = vsyncadd [#allocation3], 0
      %s19 = sshll.u32 %s0, 4
      %s20 = int_to_ptr.hbm [resolvable:$true] %s19
      %s21 = sshll.u32 [#allocation2], 4
      %s22 = int_to_ptr.vmem [resolvable:$true] %s21
      %24 = dma.hbm_to_vmem [thread:$0]  %s20, 64, %s22, [#allocation3]
    $region5: #{tpu_custom_call.1} parent=1 // pred_fallthru
      _
    // Predicated region
    $region6: #{tpu_custom_call.1} parent=1 // pred_check
      _
    $region7: #{tpu_custom_call.1} parent=1 // pred_check_branch
      %26 = sbr.rel (0) target = $region9
    $region8: #{tpu_custom_call.1} parent=1 // pred_region
      _
    $region9: #{tpu_custom_call.1} parent=1 // pred_fallthru
      _
    // Predicated region
    $region10: #{tpu_custom_call.1} parent=1 // pred_check
      _
    $region11: #{tpu_custom_call.1} parent=1 // pred_check_branch
      %28 = sbr.rel (0) target = $region13
    $region12: #{tpu_custom_call.1} parent=1 // pred_region
      _
    $region13: #{tpu_custom_call.1} parent=1 // pred_fallthru
      _
    // Predicated region
    $region14: #{tpu_custom_call.1} parent=1 // pred_check
      _
    $region15: #{tpu_custom_call.1} parent=1 // pred_check_branch
      %30 = sbr.rel (0) target = $region17
    $region16: #{tpu_custom_call.1} parent=1 // pred_region
      _
    $region17: #{tpu_custom_call.1} parent=1 // pred_fallthru
      _
    // Predicated region
    $region18: #{tpu_custom_call.1} parent=1 // pred_check
      _
    $region19: #{tpu_custom_call.1} parent=1 // pred_check_branch
      %32 = sbr.rel (0) target = $region21
    $region20: #{tpu_custom_call.1} parent=1 // pred_region
      _
    $region21: #{tpu_custom_call.1} parent=1 // pred_fallthru
      _
    // Predicated region
    $region22: #{tpu_custom_call.1} parent=1 // pred_check
      _
    $region23: #{tpu_custom_call.1} parent=1 // pred_check_branch
      %34 = sbr.rel (0) target = $region25
    $region24: #{tpu_custom_call.1} parent=1 // pred_region
      _
    $region25: #{tpu_custom_call.1} parent=1 // pred_fallthru
      _
    // Predicated region
    $region26: #{tpu_custom_call.1} parent=1 // pred_check
      _
    $region27: #{tpu_custom_call.1} parent=1 // pred_check_branch
      %36 = sbr.rel (0) target = $region29
    $region28: #{tpu_custom_call.1} parent=1 // pred_region
      _
    $region29: #{tpu_custom_call.1} parent=1 // pred_fallthru
      _
    // Predicated region
    $region30: #{tpu_custom_call.1} parent=1 // pred_check
      _
    $region31: #{tpu_custom_call.1} parent=1 // pred_check_branch
      %38 = sbr.rel (0) target = $region33
    $region32: #{tpu_custom_call.1} parent=1 // pred_region
      %40 = dma.done [#allocation3], 64
    $region33: #{tpu_custom_call.1} parent=1 // pred_fallthru
      _
    %v42 = vld [vmem:[#allocation2] sm:$0xf]
    %v43 = vld [vmem:[%s1] sm:$0xf]
    %v44 = vld [vmem:[%s1 + $0x4] sm:$0xf]
    %v45 = vld [vmem:[%s2] sm:$0x1]
    %v47 = vperm.slane %v45, 0
    %v51 = vunpack.c.l.b16 %v43
    %v52 = vunpack.c.l.b16 %v44
    %v53 = vpack.c.b16 %v52, %v51
    %vm55 = vcmask 130048
    %v57 = vsel %vm55, %v42, 0
    %59 = vmatpush.bf16.msra.mxu0 0
    %60 = vmatpush.bf16.msra.mxu0 0
    %61 = vmatpush.bf16.msra.mxu0 0
    %62 = vmatpush.bf16.msra.mxu0 0
    %63 = vmatpush.bf16.msra.mxu0 0
    %64 = vmatpush.bf16.msra.mxu0 0
    %65 = vmatpush.bf16.msra.mxu0 0
    %66 = vmatpush.bf16.msra.mxu0 %v53
    %67 = vmatmul.bf16.gmra.mxu0 %v57
    %v68 = vpop.f32.mrf.mxu0
    %v69 = vadd.f32 %v47, %v68
    %v70 = vpop.f32.mrf.mxu0
    %71 = vdwg.mxu0
    %v72 = vmax.f32 %v69, 0.0
    %v73 = vpack.c.bf16 %v72, %v72
    %v74 = vld [vmem:[%s3] sm:$0xf]
    %v75 = vld [vmem:[%s3 + $0x4] sm:$0xf]
    %v76 = vld [vmem:[%s3 + $0x8] sm:$0xf]
    %v77 = vld [vmem:[%s3 + $0xc] sm:$0xf]
    %v78 = vld [vmem:[%s4] sm:$0x1]
    %v80 = vperm.slane %v78, 0
    %v86 = vunpack.c.l.b16 %v74
    %v87 = vunpack.c.l.b16 %v75
    %v88 = vunpack.c.l.b16 %v76
    %v89 = vunpack.c.l.b16 %v77
    %v90 = vpack.c.b16 %v87, %v86
    %v91 = vpack.c.b16 %v89, %v88
    %vm94 = vcmask 261120
    %v96 = vsel %vm94, %v73, 0
    %98 = vmatpush.bf16.msra.mxu0 0
    %99 = vmatpush.bf16.msra.mxu0 0
    %100 = vmatpush.bf16.msra.mxu0 0
    %101 = vmatpush.bf16.msra.mxu0 0
    %102 = vmatpush.bf16.msra.mxu0 0
    %103 = vmatpush.bf16.msra.mxu0 0
    %104 = vmatpush.bf16.msra.mxu0 %v91
    %105 = vmatpush.bf16.msra.mxu0 %v90
    %106 = vmatmul.bf16.gmra.mxu0 %v96
    %v107 = vpop.f32.mrf.mxu0
    %v108 = vadd.f32 %v80, %v107
    %v109 = vpop.f32.mrf.mxu0
    %110 = vdwg.mxu0
    %v111 = vmax.f32 %v108, 0.0
    %v112 = vpack.c.bf16 %v111, %v111
    %v113 = vld [vmem:[%s5] sm:$0xf]
    %v114 = vld [vmem:[%s5 + $0x4] sm:$0xf]
    %v115 = vld [vmem:[%s5 + $0x8] sm:$0xf]
    %v116 = vld [vmem:[%s5 + $0xc] sm:$0xf]
    %v117 = vld [vmem:[%s6] sm:$0x1]
    %v119 = vperm.slane %v117, 0
    %v125 = vunpack.c.l.b16 %v113
    %v126 = vunpack.c.l.b16 %v114
    %v127 = vunpack.c.l.b16 %v115
    %v128 = vunpack.c.l.b16 %v116
    %v129 = vpack.c.b16 %v126, %v125
    %v130 = vpack.c.b16 %v128, %v127
    %v134 = vsel %vm94, %v112, 0
    %136 = vmatpush.bf16.msra.mxu0 0
    %137 = vmatpush.bf16.msra.mxu0 0
    %138 = vmatpush.bf16.msra.mxu0 0
    %139 = vmatpush.bf16.msra.mxu0 0
    %140 = vmatpush.bf16.msra.mxu0 0
    %141 = vmatpush.bf16.msra.mxu0 0
    %142 = vmatpush.bf16.msra.mxu0 %v130
    %143 = vmatpush.bf16.msra.mxu0 %v129
    %144 = vmatmul.bf16.gmra.mxu0 %v134
    %v145 = vpop.f32.mrf.mxu0
    %v146 = vadd.f32 %v119, %v145
    %v147 = vpop.f32.mrf.mxu0
    %148 = vdwg.mxu0
    %v149 = vlaneseq
    %v150 = vand.u32 %v149, 127
    %vm151 = vcmp.ge.s32.totalorder %v150, 8
    %v152 = vmax.f32 %v146, -20.0
    %v153 = vmin.f32 %v152, 2.0
    %v154 = vsel %vm151, %v153, %v146
    %155 = vst.msk [vmem:[#allocation5] sm:$0xff] %vm55, %v154
    // Predicated region
    $region34: #{tpu_custom_call.1} parent=1 // pred_check
      _
    $region35: #{tpu_custom_call.1} parent=1 // pred_check_branch
      %157 = sbr.rel (0) target = $region37
    $region36: #{tpu_custom_call.1} parent=1 // pred_region
      %159 = vsyncadd [#allocation4], 0
      %s161 = sshll.u32 [#allocation5], 4
      %s162 = int_to_ptr.vmem [resolvable:$true] %s161
      %s163 = sshll.u32 %s7, 4
      %s164 = int_to_ptr.hbm [resolvable:$true] %s163
      %166 = dma.vmem_to_hbm [thread:$0]  %s162, 128, %s164, [#allocation4]
    $region37: #{tpu_custom_call.1} parent=1 // pred_fallthru
      _
    // Predicated region
    $region38: #{tpu_custom_call.1} parent=1 // pred_check
      _
    $region39: #{tpu_custom_call.1} parent=1 // pred_check_branch
      %168 = sbr.rel (0) target = $region41
    $region40: #{tpu_custom_call.1} parent=1 // pred_region
      %170 = dma.done [#allocation4], 128
    $region41: #{tpu_custom_call.1} parent=1 // pred_fallthru
      _
    %171 = vsyncpa [#allocation3], 1
    %172 = vsyncpa [#allocation4], 1

</llo_original>
